<compile_context>
chip_gen: v7x
topology: tpu7x:2x2x1
jax: 0.10.0
libtpu: 0.0.40
codegen_flags: <defaults>
</compile_context>

<pallas_src>
import math

import jax
import jax.numpy as jnp
from jax.experimental import pallas as pl
from jax.experimental.pallas import tpu as pltpu

LAYER_SIZES = [3, 3, 3, 3, 3, 1]
NUM_LAYERS = len(LAYER_SIZES) - 1        # 5
USE_SHORTCUT = True

# Sublane-tiles (of 128 samples each) processed per grid step: 512*128 = 64K
# samples/step.  Per-step VMEM: in 3*512*128*4 B (x2 buffers) + out 512*128*4 B
# (x2) + ~6 live (512,128) f32 temporaries  ->  ~5 MiB.
TS_MAX = 512

_GELU_C1 = math.sqrt(2.0 / math.pi)
_GELU_C2 = 0.044715 * _GELU_C1


def _gelu(x):
    # tanh-approx GELU, matching the custom GELU used by the reference module.
    # u = sqrt(2/pi)*(x + 0.044715*x^3) = x*(c1 + c2*x*x): one fewer VALU op.
    u = x * (_GELU_C1 + _GELU_C2 * (x * x))
    return 0.5 * x * (1.0 + jnp.tanh(u))


def _mlp_kernel(w_ref, b_ref, x_ref, o_ref):
    # w_ref: SMEM (NUM_LAYERS*9,) f32; layer l weights at [l*9 : l*9+in*out],
    #        row-major over (in, out).
    # b_ref: SMEM (NUM_LAYERS*3,) f32; layer l biases at [l*3 : l*3+out].
    # x_ref: VMEM (3, ts, 128); x_ref[i] = feature-i slab, fully packed tiles.
    # o_ref: VMEM (ts, 128); single output feature per sample, packed store.
    h = [x_ref[i] for i in range(LAYER_SIZES[0])]             # three (ts,128)
    for l in range(NUM_LAYERS):                               # static unroll
        fan_in, fan_out = LAYER_SIZES[l], LAYER_SIZES[l + 1]
        woff, boff = l * 9, l * 3
        ys = []
        for j in range(fan_out):
            # Each output j start-to-finish (few live block temps):
            # y_j = gelu( sum_i h_i * W[i, j] + b_j )  — scalar-broadcast FMAs.
            acc = h[0] * w_ref[woff + j]
            for i in range(1, fan_in):
                acc = acc + h[i] * w_ref[woff + i * fan_out + j]
            ys.append(_gelu(acc + b_ref[boff + j]))
        # Shortcut only when logical (unpadded) shapes match — static here,
        # exactly like the PyTorch `x.shape == layer_output.shape` check.
        if USE_SHORTCUT and fan_in == fan_out:
            h = [h[j] + ys[j] for j in range(fan_out)]
        else:
            h = ys
    o_ref[...] = h[0]


def pack_params(weights, biases):
    """Flatten unpadded per-layer params into two tiny SMEM-friendly 1-D
    arrays (45 + 15 floats). Call ONCE, outside the per-forward path."""
    w_flat = jnp.zeros((NUM_LAYERS * 9,), jnp.float32)
    b_flat = jnp.zeros((NUM_LAYERS * 3,), jnp.float32)
    for l in range(NUM_LAYERS):
        fan_in, fan_out = LAYER_SIZES[l], LAYER_SIZES[l + 1]
        w_flat = w_flat.at[l * 9:l * 9 + fan_in * fan_out].set(
            jnp.asarray(weights[l], jnp.float32).ravel())
        b_flat = b_flat.at[l * 3:l * 3 + fan_out].set(
            jnp.asarray(biases[l], jnp.float32))
    return w_flat, b_flat


def _tile_plan(batch):
    """Return (S, ts): total sublane-tiles of 128 samples, and tiles/step."""
    s0 = -(-batch // 128)                      # sublane-tiles actually needed
    if s0 <= 8:
        return 8, 8                            # one minimal (8,128) tile
    # >= 2 grid steps so both v7x TensorCores get work; ts multiple of 8.
    half = -(-s0 // 2)
    ts = min(TS_MAX, -(-half // 8) * 8)
    s = -(-s0 // ts) * ts
    return s, ts


@jax.jit
def deep_nn_forward(x, w_flat, b_flat):
    """x: (batch, 3) f32; (w_flat, b_flat) from pack_params(). -> (batch, 1)."""
    batch, in_dim = x.shape
    assert in_dim == LAYER_SIZES[0]
    S, ts = _tile_plan(batch)
    n_pad = S * 128

    # Single pad + transpose + reshape pass (XLA fuses into one copy):
    # (batch, 3) -> (3, S, 128); sample n lives at [:, n // 128, n % 128].
    x_p = jnp.pad(x.astype(jnp.float32),
                  ((0, n_pad - batch), (0, 0))).T.reshape(in_dim, S, 128)

    out_p = pl.pallas_call(
        _mlp_kernel,
        out_shape=jax.ShapeDtypeStruct((S, 128), jnp.float32),
        grid=(S // ts,),
        in_specs=[
            pl.BlockSpec(memory_space=pltpu.MemorySpace.SMEM),   # weights (45,)
            pl.BlockSpec(memory_space=pltpu.MemorySpace.SMEM),   # biases  (15,)
            pl.BlockSpec((in_dim, ts, 128), lambda i: (0, i, 0)),  # activations
        ],
        out_specs=pl.BlockSpec((ts, 128), lambda i: (i, 0)),     # packed store
        compiler_params=pltpu.CompilerParams(
            dimension_semantics=("parallel",)),
    )(w_flat, b_flat, x_p)

    # Final layer is 3 -> 1: slice the logical output back out.
    return out_p.reshape(n_pad)[:batch].reshape(batch, LAYER_SIZES[-1])


def _reference_forward(x, weights, biases):
    h = x
    for i in range(NUM_LAYERS):
        y = _gelu(h @ weights[i] + biases[i])
        if USE_SHORTCUT and h.shape == y.shape:
            h = h + y
        else:
            h = y
    return h


def _init_params(key):
    """Deterministic init mimicking nn.Linear default U[-1/sqrt(in), 1/sqrt(in)]."""
    weights, biases = [], []
    for i in range(NUM_LAYERS):
        fan_in, fan_out = LAYER_SIZES[i], LAYER_SIZES[i + 1]
        key, kw, kb = jax.random.split(key, 3)
        bound = 1.0 / jnp.sqrt(fan_in)
        weights.append(jax.random.uniform(kw, (fan_in, fan_out), jnp.float32,
                                          -bound, bound))
        biases.append(jax.random.uniform(kb, (fan_out,), jnp.float32,
                                         -bound, bound))
    return weights, biases


if __name__ == "__main__":
    key = jax.random.PRNGKey(0)
    key, kx = jax.random.split(key)
    batch = 2
    x = jax.random.normal(kx, (batch, LAYER_SIZES[0]), jnp.float32)

    weights, biases = _init_params(key)
    w_flat, b_flat = pack_params(weights, biases)   # once, outside forward

    out = deep_nn_forward(x, w_flat, b_flat)
    out = jax.block_until_ready(out)

    ref = _reference_forward(x, weights, biases)
    assert out.shape == (batch, 1), out.shape
    assert jnp.allclose(out, ref, atol=1e-5, rtol=1e-5), (out, ref)

    print("KERNEL_OK")
</pallas_src>

<mosaic_0001>
module attributes {stable_mosaic.version = 11 : i64} {
  func.func @_mlp_kernel(%arg0: i32, %arg1: memref<45xf32, #tpu.memory_space<smem>>, %arg2: memref<15xf32, #tpu.memory_space<smem>>, %arg3: memref<3x8x128xf32, #tpu.memory_space<vmem>>, %arg4: memref<8x128xf32, #tpu.memory_space<vmem>>) attributes {dimension_semantics = [#tpu.dimension_semantics<parallel>], iteration_bounds = array<i64: 1>, scalar_prefetch = 0 : i64, scratch_operands = 0 : i64, tpu.core_type = #tpu.core_type<tc>, window_params = [{transform_indices = @transform_0, window_bounds = array<i64: 45>}, {transform_indices = @transform_1, window_bounds = array<i64: 15>}, {transform_indices = @transform_2, window_bounds = array<i64: 3, 8, 128>}, {transform_indices = @transform_3, window_bounds = array<i64: 8, 128>}]} {
    %c0 = arith.constant 0 : index
    %c0_0 = arith.constant 0 : index
    %c0_1 = arith.constant 0 : index
    %0 = vector.load %arg3[%c0, %c0_0, %c0_1] : memref<3x8x128xf32, #tpu.memory_space<vmem>>, vector<1x8x128xf32>
    %1 = vector.shape_cast %0 : vector<1x8x128xf32> to vector<8x128xf32>
    %c1 = arith.constant 1 : index
    %c0_2 = arith.constant 0 : index
    %c0_3 = arith.constant 0 : index
    %2 = vector.load %arg3[%c1, %c0_2, %c0_3] : memref<3x8x128xf32, #tpu.memory_space<vmem>>, vector<1x8x128xf32>
    %3 = vector.shape_cast %2 : vector<1x8x128xf32> to vector<8x128xf32>
    %c2 = arith.constant 2 : index
    %c0_4 = arith.constant 0 : index
    %c0_5 = arith.constant 0 : index
    %4 = vector.load %arg3[%c2, %c0_4, %c0_5] : memref<3x8x128xf32, #tpu.memory_space<vmem>>, vector<1x8x128xf32>
    %5 = vector.shape_cast %4 : vector<1x8x128xf32> to vector<8x128xf32>
    %c0_6 = arith.constant 0 : index
    %6 = memref.load %arg1[%c0_6] : memref<45xf32, #tpu.memory_space<smem>>
    %7 = vector.broadcast %6 : f32 to vector<8x128xf32>
    %8 = arith.mulf %1, %7 : vector<8x128xf32>
    %c3 = arith.constant 3 : index
    %9 = memref.load %arg1[%c3] : memref<45xf32, #tpu.memory_space<smem>>
    %10 = vector.broadcast %9 : f32 to vector<8x128xf32>
    %11 = arith.mulf %3, %10 : vector<8x128xf32>
    %12 = arith.addf %8, %11 : vector<8x128xf32>
    %c6 = arith.constant 6 : index
    %13 = memref.load %arg1[%c6] : memref<45xf32, #tpu.memory_space<smem>>
    %14 = vector.broadcast %13 : f32 to vector<8x128xf32>
    %15 = arith.mulf %5, %14 : vector<8x128xf32>
    %16 = arith.addf %12, %15 : vector<8x128xf32>
    %c0_7 = arith.constant 0 : index
    %17 = memref.load %arg2[%c0_7] : memref<15xf32, #tpu.memory_space<smem>>
    %18 = vector.broadcast %17 : f32 to vector<8x128xf32>
    %19 = arith.addf %16, %18 : vector<8x128xf32>
    %20 = arith.mulf %19, %19 : vector<8x128xf32>
    %cst = arith.constant 0.0356774069 : f32
    %21 = vector.broadcast %cst : f32 to vector<8x128xf32>
    %22 = arith.mulf %21, %20 : vector<8x128xf32>
    %cst_8 = arith.constant 0.797884583 : f32
    %23 = vector.broadcast %cst_8 : f32 to vector<8x128xf32>
    %24 = arith.addf %23, %22 : vector<8x128xf32>
    %25 = arith.mulf %19, %24 : vector<8x128xf32>
    %cst_9 = arith.constant 5.000000e-01 : f32
    %26 = vector.broadcast %cst_9 : f32 to vector<8x128xf32>
    %27 = arith.mulf %26, %19 : vector<8x128xf32>
    %28 = math.tanh %25 : vector<8x128xf32>
    %cst_10 = arith.constant 1.000000e+00 : f32
    %29 = vector.broadcast %cst_10 : f32 to vector<8x128xf32>
    %30 = arith.addf %29, %28 : vector<8x128xf32>
    %31 = arith.mulf %27, %30 : vector<8x128xf32>
    %c1_11 = arith.constant 1 : index
    %32 = memref.load %arg1[%c1_11] : memref<45xf32, #tpu.memory_space<smem>>
    %33 = vector.broadcast %32 : f32 to vector<8x128xf32>
    %34 = arith.mulf %1, %33 : vector<8x128xf32>
    %c4 = arith.constant 4 : index
    %35 = memref.load %arg1[%c4] : memref<45xf32, #tpu.memory_space<smem>>
    %36 = vector.broadcast %35 : f32 to vector<8x128xf32>
    %37 = arith.mulf %3, %36 : vector<8x128xf32>
    %38 = arith.addf %34, %37 : vector<8x128xf32>
    %c7 = arith.constant 7 : index
    %39 = memref.load %arg1[%c7] : memref<45xf32, #tpu.memory_space<smem>>
    %40 = vector.broadcast %39 : f32 to vector<8x128xf32>
    %41 = arith.mulf %5, %40 : vector<8x128xf32>
    %42 = arith.addf %38, %41 : vector<8x128xf32>
    %c1_12 = arith.constant 1 : index
    %43 = memref.load %arg2[%c1_12] : memref<15xf32, #tpu.memory_space<smem>>
    %44 = vector.broadcast %43 : f32 to vector<8x128xf32>
    %45 = arith.addf %42, %44 : vector<8x128xf32>
    %46 = arith.mulf %45, %45 : vector<8x128xf32>
    %cst_13 = arith.constant 0.0356774069 : f32
    %47 = vector.broadcast %cst_13 : f32 to vector<8x128xf32>
    %48 = arith.mulf %47, %46 : vector<8x128xf32>
    %cst_14 = arith.constant 0.797884583 : f32
    %49 = vector.broadcast %cst_14 : f32 to vector<8x128xf32>
    %50 = arith.addf %49, %48 : vector<8x128xf32>
    %51 = arith.mulf %45, %50 : vector<8x128xf32>
    %cst_15 = arith.constant 5.000000e-01 : f32
    %52 = vector.broadcast %cst_15 : f32 to vector<8x128xf32>
    %53 = arith.mulf %52, %45 : vector<8x128xf32>
    %54 = math.tanh %51 : vector<8x128xf32>
    %cst_16 = arith.constant 1.000000e+00 : f32
    %55 = vector.broadcast %cst_16 : f32 to vector<8x128xf32>
    %56 = arith.addf %55, %54 : vector<8x128xf32>
    %57 = arith.mulf %53, %56 : vector<8x128xf32>
    %c2_17 = arith.constant 2 : index
    %58 = memref.load %arg1[%c2_17] : memref<45xf32, #tpu.memory_space<smem>>
    %59 = vector.broadcast %58 : f32 to vector<8x128xf32>
    %60 = arith.mulf %1, %59 : vector<8x128xf32>
    %c5 = arith.constant 5 : index
    %61 = memref.load %arg1[%c5] : memref<45xf32, #tpu.memory_space<smem>>
    %62 = vector.broadcast %61 : f32 to vector<8x128xf32>
    %63 = arith.mulf %3, %62 : vector<8x128xf32>
    %64 = arith.addf %60, %63 : vector<8x128xf32>
    %c8 = arith.constant 8 : index
    %65 = memref.load %arg1[%c8] : memref<45xf32, #tpu.memory_space<smem>>
    %66 = vector.broadcast %65 : f32 to vector<8x128xf32>
    %67 = arith.mulf %5, %66 : vector<8x128xf32>
    %68 = arith.addf %64, %67 : vector<8x128xf32>
    %c2_18 = arith.constant 2 : index
    %69 = memref.load %arg2[%c2_18] : memref<15xf32, #tpu.memory_space<smem>>
    %70 = vector.broadcast %69 : f32 to vector<8x128xf32>
    %71 = arith.addf %68, %70 : vector<8x128xf32>
    %72 = arith.mulf %71, %71 : vector<8x128xf32>
    %cst_19 = arith.constant 0.0356774069 : f32
    %73 = vector.broadcast %cst_19 : f32 to vector<8x128xf32>
    %74 = arith.mulf %73, %72 : vector<8x128xf32>
    %cst_20 = arith.constant 0.797884583 : f32
    %75 = vector.broadcast %cst_20 : f32 to vector<8x128xf32>
    %76 = arith.addf %75, %74 : vector<8x128xf32>
    %77 = arith.mulf %71, %76 : vector<8x128xf32>
    %cst_21 = arith.constant 5.000000e-01 : f32
    %78 = vector.broadcast %cst_21 : f32 to vector<8x128xf32>
    %79 = arith.mulf %78, %71 : vector<8x128xf32>
    %80 = math.tanh %77 : vector<8x128xf32>
    %cst_22 = arith.constant 1.000000e+00 : f32
    %81 = vector.broadcast %cst_22 : f32 to vector<8x128xf32>
    %82 = arith.addf %81, %80 : vector<8x128xf32>
    %83 = arith.mulf %79, %82 : vector<8x128xf32>
    %84 = arith.addf %1, %31 : vector<8x128xf32>
    %85 = arith.addf %3, %57 : vector<8x128xf32>
    %86 = arith.addf %5, %83 : vector<8x128xf32>
    %c9 = arith.constant 9 : index
    %87 = memref.load %arg1[%c9] : memref<45xf32, #tpu.memory_space<smem>>
    %88 = vector.broadcast %87 : f32 to vector<8x128xf32>
    %89 = arith.mulf %84, %88 : vector<8x128xf32>
    %c12 = arith.constant 12 : index
    %90 = memref.load %arg1[%c12] : memref<45xf32, #tpu.memory_space<smem>>
    %91 = vector.broadcast %90 : f32 to vector<8x128xf32>
    %92 = arith.mulf %85, %91 : vector<8x128xf32>
    %93 = arith.addf %89, %92 : vector<8x128xf32>
    %c15 = arith.constant 15 : index
    %94 = memref.load %arg1[%c15] : memref<45xf32, #tpu.memory_space<smem>>
    %95 = vector.broadcast %94 : f32 to vector<8x128xf32>
    %96 = arith.mulf %86, %95 : vector<8x128xf32>
    %97 = arith.addf %93, %96 : vector<8x128xf32>
    %c3_23 = arith.constant 3 : index
    %98 = memref.load %arg2[%c3_23] : memref<15xf32, #tpu.memory_space<smem>>
    %99 = vector.broadcast %98 : f32 to vector<8x128xf32>
    %100 = arith.addf %97, %99 : vector<8x128xf32>
    %101 = arith.mulf %100, %100 : vector<8x128xf32>
    %cst_24 = arith.constant 0.0356774069 : f32
    %102 = vector.broadcast %cst_24 : f32 to vector<8x128xf32>
    %103 = arith.mulf %102, %101 : vector<8x128xf32>
    %cst_25 = arith.constant 0.797884583 : f32
    %104 = vector.broadcast %cst_25 : f32 to vector<8x128xf32>
    %105 = arith.addf %104, %103 : vector<8x128xf32>
    %106 = arith.mulf %100, %105 : vector<8x128xf32>
    %cst_26 = arith.constant 5.000000e-01 : f32
    %107 = vector.broadcast %cst_26 : f32 to vector<8x128xf32>
    %108 = arith.mulf %107, %100 : vector<8x128xf32>
    %109 = math.tanh %106 : vector<8x128xf32>
    %cst_27 = arith.constant 1.000000e+00 : f32
    %110 = vector.broadcast %cst_27 : f32 to vector<8x128xf32>
    %111 = arith.addf %110, %109 : vector<8x128xf32>
    %112 = arith.mulf %108, %111 : vector<8x128xf32>
    %c10 = arith.constant 10 : index
    %113 = memref.load %arg1[%c10] : memref<45xf32, #tpu.memory_space<smem>>
    %114 = vector.broadcast %113 : f32 to vector<8x128xf32>
    %115 = arith.mulf %84, %114 : vector<8x128xf32>
    %c13 = arith.constant 13 : index
    %116 = memref.load %arg1[%c13] : memref<45xf32, #tpu.memory_space<smem>>
    %117 = vector.broadcast %116 : f32 to vector<8x128xf32>
    %118 = arith.mulf %85, %117 : vector<8x128xf32>
    %119 = arith.addf %115, %118 : vector<8x128xf32>
    %c16 = arith.constant 16 : index
    %120 = memref.load %arg1[%c16] : memref<45xf32, #tpu.memory_space<smem>>
    %121 = vector.broadcast %120 : f32 to vector<8x128xf32>
    %122 = arith.mulf %86, %121 : vector<8x128xf32>
    %123 = arith.addf %119, %122 : vector<8x128xf32>
    %c4_28 = arith.constant 4 : index
    %124 = memref.load %arg2[%c4_28] : memref<15xf32, #tpu.memory_space<smem>>
    %125 = vector.broadcast %124 : f32 to vector<8x128xf32>
    %126 = arith.addf %123, %125 : vector<8x128xf32>
    %127 = arith.mulf %126, %126 : vector<8x128xf32>
    %cst_29 = arith.constant 0.0356774069 : f32
    %128 = vector.broadcast %cst_29 : f32 to vector<8x128xf32>
    %129 = arith.mulf %128, %127 : vector<8x128xf32>
    %cst_30 = arith.constant 0.797884583 : f32
    %130 = vector.broadcast %cst_30 : f32 to vector<8x128xf32>
    %131 = arith.addf %130, %129 : vector<8x128xf32>
    %132 = arith.mulf %126, %131 : vector<8x128xf32>
    %cst_31 = arith.constant 5.000000e-01 : f32
    %133 = vector.broadcast %cst_31 : f32 to vector<8x128xf32>
    %134 = arith.mulf %133, %126 : vector<8x128xf32>
    %135 = math.tanh %132 : vector<8x128xf32>
    %cst_32 = arith.constant 1.000000e+00 : f32
    %136 = vector.broadcast %cst_32 : f32 to vector<8x128xf32>
    %137 = arith.addf %136, %135 : vector<8x128xf32>
    %138 = arith.mulf %134, %137 : vector<8x128xf32>
    %c11 = arith.constant 11 : index
    %139 = memref.load %arg1[%c11] : memref<45xf32, #tpu.memory_space<smem>>
    %140 = vector.broadcast %139 : f32 to vector<8x128xf32>
    %141 = arith.mulf %84, %140 : vector<8x128xf32>
    %c14 = arith.constant 14 : index
    %142 = memref.load %arg1[%c14] : memref<45xf32, #tpu.memory_space<smem>>
    %143 = vector.broadcast %142 : f32 to vector<8x128xf32>
    %144 = arith.mulf %85, %143 : vector<8x128xf32>
    %145 = arith.addf %141, %144 : vector<8x128xf32>
    %c17 = arith.constant 17 : index
    %146 = memref.load %arg1[%c17] : memref<45xf32, #tpu.memory_space<smem>>
    %147 = vector.broadcast %146 : f32 to vector<8x128xf32>
    %148 = arith.mulf %86, %147 : vector<8x128xf32>
    %149 = arith.addf %145, %148 : vector<8x128xf32>
    %c5_33 = arith.constant 5 : index
    %150 = memref.load %arg2[%c5_33] : memref<15xf32, #tpu.memory_space<smem>>
    %151 = vector.broadcast %150 : f32 to vector<8x128xf32>
    %152 = arith.addf %149, %151 : vector<8x128xf32>
    %153 = arith.mulf %152, %152 : vector<8x128xf32>
    %cst_34 = arith.constant 0.0356774069 : f32
    %154 = vector.broadcast %cst_34 : f32 to vector<8x128xf32>
    %155 = arith.mulf %154, %153 : vector<8x128xf32>
    %cst_35 = arith.constant 0.797884583 : f32
    %156 = vector.broadcast %cst_35 : f32 to vector<8x128xf32>
    %157 = arith.addf %156, %155 : vector<8x128xf32>
    %158 = arith.mulf %152, %157 : vector<8x128xf32>
    %cst_36 = arith.constant 5.000000e-01 : f32
    %159 = vector.broadcast %cst_36 : f32 to vector<8x128xf32>
    %160 = arith.mulf %159, %152 : vector<8x128xf32>
    %161 = math.tanh %158 : vector<8x128xf32>
    %cst_37 = arith.constant 1.000000e+00 : f32
    %162 = vector.broadcast %cst_37 : f32 to vector<8x128xf32>
    %163 = arith.addf %162, %161 : vector<8x128xf32>
    %164 = arith.mulf %160, %163 : vector<8x128xf32>
    %165 = arith.addf %84, %112 : vector<8x128xf32>
    %166 = arith.addf %85, %138 : vector<8x128xf32>
    %167 = arith.addf %86, %164 : vector<8x128xf32>
    %c18 = arith.constant 18 : index
    %168 = memref.load %arg1[%c18] : memref<45xf32, #tpu.memory_space<smem>>
    %169 = vector.broadcast %168 : f32 to vector<8x128xf32>
    %170 = arith.mulf %165, %169 : vector<8x128xf32>
    %c21 = arith.constant 21 : index
    %171 = memref.load %arg1[%c21] : memref<45xf32, #tpu.memory_space<smem>>
    %172 = vector.broadcast %171 : f32 to vector<8x128xf32>
    %173 = arith.mulf %166, %172 : vector<8x128xf32>
    %174 = arith.addf %170, %173 : vector<8x128xf32>
    %c24 = arith.constant 24 : index
    %175 = memref.load %arg1[%c24] : memref<45xf32, #tpu.memory_space<smem>>
    %176 = vector.broadcast %175 : f32 to vector<8x128xf32>
    %177 = arith.mulf %167, %176 : vector<8x128xf32>
    %178 = arith.addf %174, %177 : vector<8x128xf32>
    %c6_38 = arith.constant 6 : index
    %179 = memref.load %arg2[%c6_38] : memref<15xf32, #tpu.memory_space<smem>>
    %180 = vector.broadcast %179 : f32 to vector<8x128xf32>
    %181 = arith.addf %178, %180 : vector<8x128xf32>
    %182 = arith.mulf %181, %181 : vector<8x128xf32>
    %cst_39 = arith.constant 0.0356774069 : f32
    %183 = vector.broadcast %cst_39 : f32 to vector<8x128xf32>
    %184 = arith.mulf %183, %182 : vector<8x128xf32>
    %cst_40 = arith.constant 0.797884583 : f32
    %185 = vector.broadcast %cst_40 : f32 to vector<8x128xf32>
    %186 = arith.addf %185, %184 : vector<8x128xf32>
    %187 = arith.mulf %181, %186 : vector<8x128xf32>
    %cst_41 = arith.constant 5.000000e-01 : f32
    %188 = vector.broadcast %cst_41 : f32 to vector<8x128xf32>
    %189 = arith.mulf %188, %181 : vector<8x128xf32>
    %190 = math.tanh %187 : vector<8x128xf32>
    %cst_42 = arith.constant 1.000000e+00 : f32
    %191 = vector.broadcast %cst_42 : f32 to vector<8x128xf32>
    %192 = arith.addf %191, %190 : vector<8x128xf32>
    %193 = arith.mulf %189, %192 : vector<8x128xf32>
    %c19 = arith.constant 19 : index
    %194 = memref.load %arg1[%c19] : memref<45xf32, #tpu.memory_space<smem>>
    %195 = vector.broadcast %194 : f32 to vector<8x128xf32>
    %196 = arith.mulf %165, %195 : vector<8x128xf32>
    %c22 = arith.constant 22 : index
    %197 = memref.load %arg1[%c22] : memref<45xf32, #tpu.memory_space<smem>>
    %198 = vector.broadcast %197 : f32 to vector<8x128xf32>
    %199 = arith.mulf %166, %198 : vector<8x128xf32>
    %200 = arith.addf %196, %199 : vector<8x128xf32>
    %c25 = arith.constant 25 : index
    %201 = memref.load %arg1[%c25] : memref<45xf32, #tpu.memory_space<smem>>
    %202 = vector.broadcast %201 : f32 to vector<8x128xf32>
    %203 = arith.mulf %167, %202 : vector<8x128xf32>
    %204 = arith.addf %200, %203 : vector<8x128xf32>
    %c7_43 = arith.constant 7 : index
    %205 = memref.load %arg2[%c7_43] : memref<15xf32, #tpu.memory_space<smem>>
    %206 = vector.broadcast %205 : f32 to vector<8x128xf32>
    %207 = arith.addf %204, %206 : vector<8x128xf32>
    %208 = arith.mulf %207, %207 : vector<8x128xf32>
    %cst_44 = arith.constant 0.0356774069 : f32
    %209 = vector.broadcast %cst_44 : f32 to vector<8x128xf32>
    %210 = arith.mulf %209, %208 : vector<8x128xf32>
    %cst_45 = arith.constant 0.797884583 : f32
    %211 = vector.broadcast %cst_45 : f32 to vector<8x128xf32>
    %212 = arith.addf %211, %210 : vector<8x128xf32>
    %213 = arith.mulf %207, %212 : vector<8x128xf32>
    %cst_46 = arith.constant 5.000000e-01 : f32
    %214 = vector.broadcast %cst_46 : f32 to vector<8x128xf32>
    %215 = arith.mulf %214, %207 : vector<8x128xf32>
    %216 = math.tanh %213 : vector<8x128xf32>
    %cst_47 = arith.constant 1.000000e+00 : f32
    %217 = vector.broadcast %cst_47 : f32 to vector<8x128xf32>
    %218 = arith.addf %217, %216 : vector<8x128xf32>
    %219 = arith.mulf %215, %218 : vector<8x128xf32>
    %c20 = arith.constant 20 : index
    %220 = memref.load %arg1[%c20] : memref<45xf32, #tpu.memory_space<smem>>
    %221 = vector.broadcast %220 : f32 to vector<8x128xf32>
    %222 = arith.mulf %165, %221 : vector<8x128xf32>
    %c23 = arith.constant 23 : index
    %223 = memref.load %arg1[%c23] : memref<45xf32, #tpu.memory_space<smem>>
    %224 = vector.broadcast %223 : f32 to vector<8x128xf32>
    %225 = arith.mulf %166, %224 : vector<8x128xf32>
    %226 = arith.addf %222, %225 : vector<8x128xf32>
    %c26 = arith.constant 26 : index
    %227 = memref.load %arg1[%c26] : memref<45xf32, #tpu.memory_space<smem>>
    %228 = vector.broadcast %227 : f32 to vector<8x128xf32>
    %229 = arith.mulf %167, %228 : vector<8x128xf32>
    %230 = arith.addf %226, %229 : vector<8x128xf32>
    %c8_48 = arith.constant 8 : index
    %231 = memref.load %arg2[%c8_48] : memref<15xf32, #tpu.memory_space<smem>>
    %232 = vector.broadcast %231 : f32 to vector<8x128xf32>
    %233 = arith.addf %230, %232 : vector<8x128xf32>
    %234 = arith.mulf %233, %233 : vector<8x128xf32>
    %cst_49 = arith.constant 0.0356774069 : f32
    %235 = vector.broadcast %cst_49 : f32 to vector<8x128xf32>
    %236 = arith.mulf %235, %234 : vector<8x128xf32>
    %cst_50 = arith.constant 0.797884583 : f32
    %237 = vector.broadcast %cst_50 : f32 to vector<8x128xf32>
    %238 = arith.addf %237, %236 : vector<8x128xf32>
    %239 = arith.mulf %233, %238 : vector<8x128xf32>
    %cst_51 = arith.constant 5.000000e-01 : f32
    %240 = vector.broadcast %cst_51 : f32 to vector<8x128xf32>
    %241 = arith.mulf %240, %233 : vector<8x128xf32>
    %242 = math.tanh %239 : vector<8x128xf32>
    %cst_52 = arith.constant 1.000000e+00 : f32
    %243 = vector.broadcast %cst_52 : f32 to vector<8x128xf32>
    %244 = arith.addf %243, %242 : vector<8x128xf32>
    %245 = arith.mulf %241, %244 : vector<8x128xf32>
    %246 = arith.addf %165, %193 : vector<8x128xf32>
    %247 = arith.addf %166, %219 : vector<8x128xf32>
    %248 = arith.addf %167, %245 : vector<8x128xf32>
    %c27 = arith.constant 27 : index
    %249 = memref.load %arg1[%c27] : memref<45xf32, #tpu.memory_space<smem>>
    %250 = vector.broadcast %249 : f32 to vector<8x128xf32>
    %251 = arith.mulf %246, %250 : vector<8x128xf32>
    %c30 = arith.constant 30 : index
    %252 = memref.load %arg1[%c30] : memref<45xf32, #tpu.memory_space<smem>>
    %253 = vector.broadcast %252 : f32 to vector<8x128xf32>
    %254 = arith.mulf %247, %253 : vector<8x128xf32>
    %255 = arith.addf %251, %254 : vector<8x128xf32>
    %c33 = arith.constant 33 : index
    %256 = memref.load %arg1[%c33] : memref<45xf32, #tpu.memory_space<smem>>
    %257 = vector.broadcast %256 : f32 to vector<8x128xf32>
    %258 = arith.mulf %248, %257 : vector<8x128xf32>
    %259 = arith.addf %255, %258 : vector<8x128xf32>
    %c9_53 = arith.constant 9 : index
    %260 = memref.load %arg2[%c9_53] : memref<15xf32, #tpu.memory_space<smem>>
    %261 = vector.broadcast %260 : f32 to vector<8x128xf32>
    %262 = arith.addf %259, %261 : vector<8x128xf32>
    %263 = arith.mulf %262, %262 : vector<8x128xf32>
    %cst_54 = arith.constant 0.0356774069 : f32
    %264 = vector.broadcast %cst_54 : f32 to vector<8x128xf32>
    %265 = arith.mulf %264, %263 : vector<8x128xf32>
    %cst_55 = arith.constant 0.797884583 : f32
    %266 = vector.broadcast %cst_55 : f32 to vector<8x128xf32>
    %267 = arith.addf %266, %265 : vector<8x128xf32>
    %268 = arith.mulf %262, %267 : vector<8x128xf32>
    %cst_56 = arith.constant 5.000000e-01 : f32
    %269 = vector.broadcast %cst_56 : f32 to vector<8x128xf32>
    %270 = arith.mulf %269, %262 : vector<8x128xf32>
    %271 = math.tanh %268 : vector<8x128xf32>
    %cst_57 = arith.constant 1.000000e+00 : f32
    %272 = vector.broadcast %cst_57 : f32 to vector<8x128xf32>
    %273 = arith.addf %272, %271 : vector<8x128xf32>
    %274 = arith.mulf %270, %273 : vector<8x128xf32>
    %c28 = arith.constant 28 : index
    %275 = memref.load %arg1[%c28] : memref<45xf32, #tpu.memory_space<smem>>
    %276 = vector.broadcast %275 : f32 to vector<8x128xf32>
    %277 = arith.mulf %246, %276 : vector<8x128xf32>
    %c31 = arith.constant 31 : index
    %278 = memref.load %arg1[%c31] : memref<45xf32, #tpu.memory_space<smem>>
    %279 = vector.broadcast %278 : f32 to vector<8x128xf32>
    %280 = arith.mulf %247, %279 : vector<8x128xf32>
    %281 = arith.addf %277, %280 : vector<8x128xf32>
    %c34 = arith.constant 34 : index
    %282 = memref.load %arg1[%c34] : memref<45xf32, #tpu.memory_space<smem>>
    %283 = vector.broadcast %282 : f32 to vector<8x128xf32>
    %284 = arith.mulf %248, %283 : vector<8x128xf32>
    %285 = arith.addf %281, %284 : vector<8x128xf32>
    %c10_58 = arith.constant 10 : index
    %286 = memref.load %arg2[%c10_58] : memref<15xf32, #tpu.memory_space<smem>>
    %287 = vector.broadcast %286 : f32 to vector<8x128xf32>
    %288 = arith.addf %285, %287 : vector<8x128xf32>
    %289 = arith.mulf %288, %288 : vector<8x128xf32>
    %cst_59 = arith.constant 0.0356774069 : f32
    %290 = vector.broadcast %cst_59 : f32 to vector<8x128xf32>
    %291 = arith.mulf %290, %289 : vector<8x128xf32>
    %cst_60 = arith.constant 0.797884583 : f32
    %292 = vector.broadcast %cst_60 : f32 to vector<8x128xf32>
    %293 = arith.addf %292, %291 : vector<8x128xf32>
    %294 = arith.mulf %288, %293 : vector<8x128xf32>
    %cst_61 = arith.constant 5.000000e-01 : f32
    %295 = vector.broadcast %cst_61 : f32 to vector<8x128xf32>
    %296 = arith.mulf %295, %288 : vector<8x128xf32>
    %297 = math.tanh %294 : vector<8x128xf32>
    %cst_62 = arith.constant 1.000000e+00 : f32
    %298 = vector.broadcast %cst_62 : f32 to vector<8x128xf32>
    %299 = arith.addf %298, %297 : vector<8x128xf32>
    %300 = arith.mulf %296, %299 : vector<8x128xf32>
    %c29 = arith.constant 29 : index
    %301 = memref.load %arg1[%c29] : memref<45xf32, #tpu.memory_space<smem>>
    %302 = vector.broadcast %301 : f32 to vector<8x128xf32>
    %303 = arith.mulf %246, %302 : vector<8x128xf32>
    %c32 = arith.constant 32 : index
    %304 = memref.load %arg1[%c32] : memref<45xf32, #tpu.memory_space<smem>>
    %305 = vector.broadcast %304 : f32 to vector<8x128xf32>
    %306 = arith.mulf %247, %305 : vector<8x128xf32>
    %307 = arith.addf %303, %306 : vector<8x128xf32>
    %c35 = arith.constant 35 : index
    %308 = memref.load %arg1[%c35] : memref<45xf32, #tpu.memory_space<smem>>
    %309 = vector.broadcast %308 : f32 to vector<8x128xf32>
    %310 = arith.mulf %248, %309 : vector<8x128xf32>
    %311 = arith.addf %307, %310 : vector<8x128xf32>
    %c11_63 = arith.constant 11 : index
    %312 = memref.load %arg2[%c11_63] : memref<15xf32, #tpu.memory_space<smem>>
    %313 = vector.broadcast %312 : f32 to vector<8x128xf32>
    %314 = arith.addf %311, %313 : vector<8x128xf32>
    %315 = arith.mulf %314, %314 : vector<8x128xf32>
    %cst_64 = arith.constant 0.0356774069 : f32
    %316 = vector.broadcast %cst_64 : f32 to vector<8x128xf32>
    %317 = arith.mulf %316, %315 : vector<8x128xf32>
    %cst_65 = arith.constant 0.797884583 : f32
    %318 = vector.broadcast %cst_65 : f32 to vector<8x128xf32>
    %319 = arith.addf %318, %317 : vector<8x128xf32>
    %320 = arith.mulf %314, %319 : vector<8x128xf32>
    %cst_66 = arith.constant 5.000000e-01 : f32
    %321 = vector.broadcast %cst_66 : f32 to vector<8x128xf32>
    %322 = arith.mulf %321, %314 : vector<8x128xf32>
    %323 = math.tanh %320 : vector<8x128xf32>
    %cst_67 = arith.constant 1.000000e+00 : f32
    %324 = vector.broadcast %cst_67 : f32 to vector<8x128xf32>
    %325 = arith.addf %324, %323 : vector<8x128xf32>
    %326 = arith.mulf %322, %325 : vector<8x128xf32>
    %327 = arith.addf %246, %274 : vector<8x128xf32>
    %328 = arith.addf %247, %300 : vector<8x128xf32>
    %329 = arith.addf %248, %326 : vector<8x128xf32>
    %c36 = arith.constant 36 : index
    %330 = memref.load %arg1[%c36] : memref<45xf32, #tpu.memory_space<smem>>
    %331 = vector.broadcast %330 : f32 to vector<8x128xf32>
    %332 = arith.mulf %327, %331 : vector<8x128xf32>
    %c37 = arith.constant 37 : index
    %333 = memref.load %arg1[%c37] : memref<45xf32, #tpu.memory_space<smem>>
    %334 = vector.broadcast %333 : f32 to vector<8x128xf32>
    %335 = arith.mulf %328, %334 : vector<8x128xf32>
    %336 = arith.addf %332, %335 : vector<8x128xf32>
    %c38 = arith.constant 38 : index
    %337 = memref.load %arg1[%c38] : memref<45xf32, #tpu.memory_space<smem>>
    %338 = vector.broadcast %337 : f32 to vector<8x128xf32>
    %339 = arith.mulf %329, %338 : vector<8x128xf32>
    %340 = arith.addf %336, %339 : vector<8x128xf32>
    %c12_68 = arith.constant 12 : index
    %341 = memref.load %arg2[%c12_68] : memref<15xf32, #tpu.memory_space<smem>>
    %342 = vector.broadcast %341 : f32 to vector<8x128xf32>
    %343 = arith.addf %340, %342 : vector<8x128xf32>
    %344 = arith.mulf %343, %343 : vector<8x128xf32>
    %cst_69 = arith.constant 0.0356774069 : f32
    %345 = vector.broadcast %cst_69 : f32 to vector<8x128xf32>
    %346 = arith.mulf %345, %344 : vector<8x128xf32>
    %cst_70 = arith.constant 0.797884583 : f32
    %347 = vector.broadcast %cst_70 : f32 to vector<8x128xf32>
    %348 = arith.addf %347, %346 : vector<8x128xf32>
    %349 = arith.mulf %343, %348 : vector<8x128xf32>
    %cst_71 = arith.constant 5.000000e-01 : f32
    %350 = vector.broadcast %cst_71 : f32 to vector<8x128xf32>
    %351 = arith.mulf %350, %343 : vector<8x128xf32>
    %352 = math.tanh %349 : vector<8x128xf32>
    %cst_72 = arith.constant 1.000000e+00 : f32
    %353 = vector.broadcast %cst_72 : f32 to vector<8x128xf32>
    %354 = arith.addf %353, %352 : vector<8x128xf32>
    %355 = arith.mulf %351, %354 : vector<8x128xf32>
    %c0_73 = arith.constant 0 : index
    %c0_74 = arith.constant 0 : index
    %356 = vector.load %arg4[%c0_73, %c0_74] : memref<8x128xf32, #tpu.memory_space<vmem>>, vector<8x128xf32>
    tpu.vector_store %arg4[%c0_73, %c0_74], %355 {strides = array<i32>} : memref<8x128xf32, #tpu.memory_space<vmem>>, vector<8x128xf32>,
    return
  }
  func.func @transform_0(%arg0: i32) -> i32 {
    %c0_i32 = arith.constant 0 : i32
    %c0_i32_0 = arith.constant 0 : i32
    return %c0_i32 : i32
  }
  func.func @transform_1(%arg0: i32) -> i32 {
    %c0_i32 = arith.constant 0 : i32
    %c0_i32_0 = arith.constant 0 : i32
    return %c0_i32 : i32
  }
  func.func @transform_2(%arg0: i32) -> (i32, i32, i32) {
    %c0_i32 = arith.constant 0 : i32
    %c0_i32_0 = arith.constant 0 : i32
    %c0_i32_1 = arith.constant 0 : i32
    return %c0_i32, %arg0, %c0_i32_0 : i32, i32, i32
  }
  func.func @transform_3(%arg0: i32) -> (i32, i32) {
    %c0_i32 = arith.constant 0 : i32
    %c0_i32_0 = arith.constant 0 : i32
    return %arg0, %c0_i32 : i32, i32
  }
}

</mosaic_0001>

<llo_original>
// kernel: deep_nn_forward.1
$region0: #{deep_nn_forward.1}
  #allocation0 [shape = 'u32[]', space=smem, size = 0x4, offset = 0x4, fixed_abs, tag = 'smem constant byte address 0x4 - core index']
  #allocation1 [shape = 'u32[144,128]{1,0:T(1,128)}', space=vmem, size = 0x12000, scoped, tag = 'internal scratch']
  %s0 = inlined_call_operand.vmem [shape: f32[45], index: 0, kind: input, shape index: {}]
  %s1 = inlined_call_operand.vmem [shape: f32[15], index: 1, kind: input, shape index: {}]
  %s2 = inlined_call_operand.vmem [shape: f32[3,8,128], index: 2, kind: input, shape index: {}]
  %s3 = inlined_call_operand.vmem [shape: f32[8,128], index: 3, kind: output, shape index: {}]
  %s4 = sld [smem:[#allocation0]]
  $region30: #{deep_nn_forward.1} parent=0
    _
  %s6 = ssub.s32 1, %s4
  %s7 = scalar_select 0, %s6, %s4
  $region1: #{deep_nn_forward.1} parent=0
    #allocation2 [shape = 'u8[512]{0}', space=smem, size = 0x200, scoped, tag = 'input window, operand 0, single buffered']
    #allocation3 [shape = 's32[1]{0}', space=sflag, size = 0x4, scoped, tag = 'scoped memory for deep_nn_forward.1']
    #allocation4 [shape = 'u8[512]{0}', space=smem, size = 0x200, scoped, tag = 'input window, operand 1, single buffered']
    #allocation5 [shape = 's32[1]{0}', space=sflag, size = 0x4, scoped, tag = 'scoped memory for deep_nn_forward.1']
    %8 = vsyncpa [#allocation3], 0
    %9 = vsyncpa [#allocation5], 0
    // Predicated region
    $region2: #{deep_nn_forward.1} parent=1 // pred_check
      _
    $region3: #{deep_nn_forward.1} parent=1 // pred_check_branch
      %11 = sbr.rel (0) target = $region5
    $region4: #{deep_nn_forward.1} parent=1 // pred_region
      %s13 = ssub.s32 16, 16
      %14 = vsyncadd [#allocation3], %s13
      %s16 = sshll.u32 %s0, 4
      %s17 = int_to_ptr.vmem [resolvable:$true] %s16
      %19 = dma.vmem_to_smem %s17, 16, [#allocation2], [#allocation3]
    $region5: #{deep_nn_forward.1} parent=1 // pred_fallthru
      _
    // Predicated region
    $region6: #{deep_nn_forward.1} parent=1 // pred_check
      _
    $region7: #{deep_nn_forward.1} parent=1 // pred_check_branch
      %21 = sbr.rel (0) target = $region9
    $region8: #{deep_nn_forward.1} parent=1 // pred_region
      %s23 = ssub.s32 16, 16
      %24 = vsyncadd [#allocation5], %s23
      %s26 = sshll.u32 %s1, 4
      %s27 = int_to_ptr.vmem [resolvable:$true] %s26
      %29 = dma.vmem_to_smem %s27, 16, [#allocation4], [#allocation5]
    $region9: #{deep_nn_forward.1} parent=1 // pred_fallthru
      _
    // Predicated region
    $region10: #{deep_nn_forward.1} parent=1 // pred_check
      _
    $region11: #{deep_nn_forward.1} parent=1 // pred_check_branch
      %31 = sbr.rel (0) target = $region13
    $region12: #{deep_nn_forward.1} parent=1 // pred_region
      _
    $region13: #{deep_nn_forward.1} parent=1 // pred_fallthru
      _
    // Predicated region
    $region14: #{deep_nn_forward.1} parent=1 // pred_check
      _
    $region15: #{deep_nn_forward.1} parent=1 // pred_check_branch
      %33 = sbr.rel (0) target = $region17
    $region16: #{deep_nn_forward.1} parent=1 // pred_region
      %34 = dma.done [#allocation3], 16
    $region17: #{deep_nn_forward.1} parent=1 // pred_fallthru
      _
    // Predicated region
    $region18: #{deep_nn_forward.1} parent=1 // pred_check
      _
    $region19: #{deep_nn_forward.1} parent=1 // pred_check_branch
      %36 = sbr.rel (0) target = $region21
    $region20: #{deep_nn_forward.1} parent=1 // pred_region
      %37 = dma.done [#allocation5], 16
    $region21: #{deep_nn_forward.1} parent=1 // pred_fallthru
      _
    %38 = sfence
    %v39 = vld [vmem:[%s2] sm:$0xff]
    %s40 = scalar_lea.vmem %s2, 8
    %v41 = vld [vmem:[%s40] sm:$0xff]
    %s42 = scalar_lea.vmem %s2, 16
    %v43 = vld [vmem:[%s42] sm:$0xff]
    %s44 = sld [smem:[#allocation2]]
    %v45 = vstv %s44
    %v46 = vmul.f32 %v39, %v45
    %s47 = sld [smem:[#allocation2 + $0x3]]
    %v48 = vstv %s47
    %v49 = vmul.f32 %v41, %v48
    %v50 = vadd.f32 %v46, %v49
    %s51 = sld [smem:[#allocation2 + $0x6]]
    %v52 = vstv %s51
    %v53 = vmul.f32 %v43, %v52
    %v54 = vadd.f32 %v50, %v53
    %s55 = sld [smem:[#allocation4]]
    %v56 = vstv %s55
    %v57 = vadd.f32 %v54, %v56
    %v58 = vmul.f32 %v57, %v57
    %v59 = vmul.f32 %v58, 0.035677407
    %v60 = vadd.f32 %v59, 0.7978846
    %v61 = vmul.f32 %v57, %v60
    %v62 = vmul.f32 %v57, 0.5
    %v63 = vtanh.pop %v61
    %v64 = vadd.f32 %v63, 1.0
    %v65 = vmul.f32 %v62, %v64
    %s66 = sld [smem:[#allocation2 + $0x1]]
    %v67 = vstv %s66
    %v68 = vmul.f32 %v39, %v67
    %s69 = sld [smem:[#allocation2 + $0x4]]
    %v70 = vstv %s69
    %v71 = vmul.f32 %v41, %v70
    %v72 = vadd.f32 %v68, %v71
    %s73 = sld [smem:[#allocation2 + $0x7]]
    %v74 = vstv %s73
    %v75 = vmul.f32 %v43, %v74
    %v76 = vadd.f32 %v72, %v75
    %s77 = sld [smem:[#allocation4 + $0x1]]
    %v78 = vstv %s77
    %v79 = vadd.f32 %v76, %v78
    %v80 = vmul.f32 %v79, %v79
    %v81 = vmul.f32 %v80, 0.035677407
    %v82 = vadd.f32 %v81, 0.7978846
    %v83 = vmul.f32 %v79, %v82
    %v84 = vmul.f32 %v79, 0.5
    %v85 = vtanh.pop %v83
    %v86 = vadd.f32 %v85, 1.0
    %v87 = vmul.f32 %v84, %v86
    %s88 = sld [smem:[#allocation2 + $0x2]]
    %v89 = vstv %s88
    %v90 = vmul.f32 %v39, %v89
    %s91 = sld [smem:[#allocation2 + $0x5]]
    %v92 = vstv %s91
    %v93 = vmul.f32 %v41, %v92
    %v94 = vadd.f32 %v90, %v93
    %s95 = sld [smem:[#allocation2 + $0x8]]
    %v96 = vstv %s95
    %v97 = vmul.f32 %v43, %v96
    %v98 = vadd.f32 %v94, %v97
    %s99 = sld [smem:[#allocation4 + $0x2]]
    %v100 = vstv %s99
    %v101 = vadd.f32 %v98, %v100
    %v102 = vmul.f32 %v101, %v101
    %v103 = vmul.f32 %v102, 0.035677407
    %v104 = vadd.f32 %v103, 0.7978846
    %v105 = vmul.f32 %v101, %v104
    %v106 = vmul.f32 %v101, 0.5
    %v107 = vtanh.pop %v105
    %v108 = vadd.f32 %v107, 1.0
    %v109 = vmul.f32 %v106, %v108
    %v110 = vadd.f32 %v39, %v65
    %v111 = vadd.f32 %v41, %v87
    %v112 = vadd.f32 %v43, %v109
    %s113 = sld [smem:[#allocation2 + $0x9]]
    %v114 = vstv %s113
    %v115 = vmul.f32 %v110, %v114
    %s116 = sld [smem:[#allocation2 + $0xc]]
    %v117 = vstv %s116
    %v118 = vmul.f32 %v111, %v117
    %v119 = vadd.f32 %v115, %v118
    %s120 = sld [smem:[#allocation2 + $0xf]]
    %v121 = vstv %s120
    %v122 = vmul.f32 %v112, %v121
    %v123 = vadd.f32 %v119, %v122
    %s124 = sld [smem:[#allocation4 + $0x3]]
    %v125 = vstv %s124
    %v126 = vadd.f32 %v123, %v125
    %v127 = vmul.f32 %v126, %v126
    %v128 = vmul.f32 %v127, 0.035677407
    %v129 = vadd.f32 %v128, 0.7978846
    %v130 = vmul.f32 %v126, %v129
    %v131 = vmul.f32 %v126, 0.5
    %v132 = vtanh.pop %v130
    %v133 = vadd.f32 %v132, 1.0
    %v134 = vmul.f32 %v131, %v133
    %s135 = sld [smem:[#allocation2 + $0xa]]
    %v136 = vstv %s135
    %v137 = vmul.f32 %v110, %v136
    %s138 = sld [smem:[#allocation2 + $0xd]]
    %v139 = vstv %s138
    %v140 = vmul.f32 %v111, %v139
    %v141 = vadd.f32 %v137, %v140
    %s142 = sld [smem:[#allocation2 + $0x10]]
    %v143 = vstv %s142
    %v144 = vmul.f32 %v112, %v143
    %v145 = vadd.f32 %v141, %v144
    %s146 = sld [smem:[#allocation4 + $0x4]]
    %v147 = vstv %s146
    %v148 = vadd.f32 %v145, %v147
    %v149 = vmul.f32 %v148, %v148
    %v150 = vmul.f32 %v149, 0.035677407
    %v151 = vadd.f32 %v150, 0.7978846
    %v152 = vmul.f32 %v148, %v151
    %v153 = vmul.f32 %v148, 0.5
    %v154 = vtanh.pop %v152
    %v155 = vadd.f32 %v154, 1.0
    %v156 = vmul.f32 %v153, %v155
    %s157 = sld [smem:[#allocation2 + $0xb]]
    %v158 = vstv %s157
    %v159 = vmul.f32 %v110, %v158
    %s160 = sld [smem:[#allocation2 + $0xe]]
    %v161 = vstv %s160
    %v162 = vmul.f32 %v111, %v161
    %v163 = vadd.f32 %v159, %v162
    %s164 = sld [smem:[#allocation2 + $0x11]]
    %v165 = vstv %s164
    %v166 = vmul.f32 %v112, %v165
    %v167 = vadd.f32 %v163, %v166
    %s168 = sld [smem:[#allocation4 + $0x5]]
    %v169 = vstv %s168
    %v170 = vadd.f32 %v167, %v169
    %v171 = vmul.f32 %v170, %v170
    %v172 = vmul.f32 %v171, 0.035677407
    %v173 = vadd.f32 %v172, 0.7978846
    %v174 = vmul.f32 %v170, %v173
    %v175 = vmul.f32 %v170, 0.5
    %v176 = vtanh.pop %v174
    %v177 = vadd.f32 %v176, 1.0
    %v178 = vmul.f32 %v175, %v177
    %v179 = vadd.f32 %v110, %v134
    %v180 = vadd.f32 %v111, %v156
    %v181 = vadd.f32 %v112, %v178
    %s182 = sld [smem:[#allocation2 + $0x12]]
    %v183 = vstv %s182
    %v184 = vmul.f32 %v179, %v183
    %s185 = sld [smem:[#allocation2 + $0x15]]
    %v186 = vstv %s185
    %v187 = vmul.f32 %v180, %v186
    %v188 = vadd.f32 %v184, %v187
    %s189 = sld [smem:[#allocation2 + $0x18]]
    %v190 = vstv %s189
    %v191 = vmul.f32 %v181, %v190
    %v192 = vadd.f32 %v188, %v191
    %s193 = sld [smem:[#allocation4 + $0x6]]
    %v194 = vstv %s193
    %v195 = vadd.f32 %v192, %v194
    %v196 = vmul.f32 %v195, %v195
    %v197 = vmul.f32 %v196, 0.035677407
    %v198 = vadd.f32 %v197, 0.7978846
    %v199 = vmul.f32 %v195, %v198
    %v200 = vmul.f32 %v195, 0.5
    %v201 = vtanh.pop %v199
    %v202 = vadd.f32 %v201, 1.0
    %v203 = vmul.f32 %v200, %v202
    %s204 = sld [smem:[#allocation2 + $0x13]]
    %v205 = vstv %s204
    %v206 = vmul.f32 %v179, %v205
    %s207 = sld [smem:[#allocation2 + $0x16]]
    %v208 = vstv %s207
    %v209 = vmul.f32 %v180, %v208
    %v210 = vadd.f32 %v206, %v209
    %s211 = sld [smem:[#allocation2 + $0x19]]
    %v212 = vstv %s211
    %v213 = vmul.f32 %v181, %v212
    %v214 = vadd.f32 %v210, %v213
    %s215 = sld [smem:[#allocation4 + $0x7]]
    %v216 = vstv %s215
    %v217 = vadd.f32 %v214, %v216
    %v218 = vmul.f32 %v217, %v217
    %v219 = vmul.f32 %v218, 0.035677407
    %v220 = vadd.f32 %v219, 0.7978846
    %v221 = vmul.f32 %v217, %v220
    %v222 = vmul.f32 %v217, 0.5
    %v223 = vtanh.pop %v221
    %v224 = vadd.f32 %v223, 1.0
    %v225 = vmul.f32 %v222, %v224
    %s226 = sld [smem:[#allocation2 + $0x14]]
    %v227 = vstv %s226
    %v228 = vmul.f32 %v179, %v227
    %s229 = sld [smem:[#allocation2 + $0x17]]
    %v230 = vstv %s229
    %v231 = vmul.f32 %v180, %v230
    %v232 = vadd.f32 %v228, %v231
    %s233 = sld [smem:[#allocation2 + $0x1a]]
    %v234 = vstv %s233
    %v235 = vmul.f32 %v181, %v234
    %v236 = vadd.f32 %v232, %v235
    %s237 = sld [smem:[#allocation4 + $0x8]]
    %v238 = vstv %s237
    %v239 = vadd.f32 %v236, %v238
    %v240 = vmul.f32 %v239, %v239
    %v241 = vmul.f32 %v240, 0.035677407
    %v242 = vadd.f32 %v241, 0.7978846
    %v243 = vmul.f32 %v239, %v242
    %v244 = vmul.f32 %v239, 0.5
    %v245 = vtanh.pop %v243
    %v246 = vadd.f32 %v245, 1.0
    %v247 = vmul.f32 %v244, %v246
    %v248 = vadd.f32 %v179, %v203
    %v249 = vadd.f32 %v180, %v225
    %v250 = vadd.f32 %v181, %v247
    %s251 = sld [smem:[#allocation2 + $0x1b]]
    %v252 = vstv %s251
    %v253 = vmul.f32 %v248, %v252
    %s254 = sld [smem:[#allocation2 + $0x1e]]
    %v255 = vstv %s254
    %v256 = vmul.f32 %v249, %v255
    %v257 = vadd.f32 %v253, %v256
    %s258 = sld [smem:[#allocation2 + $0x21]]
    %v259 = vstv %s258
    %v260 = vmul.f32 %v250, %v259
    %v261 = vadd.f32 %v257, %v260
    %s262 = sld [smem:[#allocation4 + $0x9]]
    %v263 = vstv %s262
    %v264 = vadd.f32 %v261, %v263
    %v265 = vmul.f32 %v264, %v264
    %v266 = vmul.f32 %v265, 0.035677407
    %v267 = vadd.f32 %v266, 0.7978846
    %v268 = vmul.f32 %v264, %v267
    %v269 = vmul.f32 %v264, 0.5
    %v270 = vtanh.pop %v268
    %v271 = vadd.f32 %v270, 1.0
    %v272 = vmul.f32 %v269, %v271
    %s273 = sld [smem:[#allocation2 + $0x1c]]
    %v274 = vstv %s273
    %v275 = vmul.f32 %v248, %v274
    %s276 = sld [smem:[#allocation2 + $0x1f]]
    %v277 = vstv %s276
    %v278 = vmul.f32 %v249, %v277
    %v279 = vadd.f32 %v275, %v278
    %s280 = sld [smem:[#allocation2 + $0x22]]
    %v281 = vstv %s280
    %v282 = vmul.f32 %v250, %v281
    %v283 = vadd.f32 %v279, %v282
    %s284 = sld [smem:[#allocation4 + $0xa]]
    %v285 = vstv %s284
    %v286 = vadd.f32 %v283, %v285
    %v287 = vmul.f32 %v286, %v286
    %v288 = vmul.f32 %v287, 0.035677407
    %v289 = vadd.f32 %v288, 0.7978846
    %v290 = vmul.f32 %v286, %v289
    %v291 = vmul.f32 %v286, 0.5
    %v292 = vtanh.pop %v290
    %v293 = vadd.f32 %v292, 1.0
    %v294 = vmul.f32 %v291, %v293
    %s295 = sld [smem:[#allocation2 + $0x1d]]
    %v296 = vstv %s295
    %v297 = vmul.f32 %v248, %v296
    %s298 = sld [smem:[#allocation2 + $0x20]]
    %v299 = vstv %s298
    %v300 = vmul.f32 %v249, %v299
    %v301 = vadd.f32 %v297, %v300
    %s302 = sld [smem:[#allocation2 + $0x23]]
    %v303 = vstv %s302
    %v304 = vmul.f32 %v250, %v303
    %v305 = vadd.f32 %v301, %v304
    %s306 = sld [smem:[#allocation4 + $0xb]]
    %v307 = vstv %s306
    %v308 = vadd.f32 %v305, %v307
    %v309 = vmul.f32 %v308, %v308
    %v310 = vmul.f32 %v309, 0.035677407
    %v311 = vadd.f32 %v310, 0.7978846
    %v312 = vmul.f32 %v308, %v311
    %v313 = vmul.f32 %v308, 0.5
    %v314 = vtanh.pop %v312
    %v315 = vadd.f32 %v314, 1.0
    %v316 = vmul.f32 %v313, %v315
    %v317 = vadd.f32 %v248, %v272
    %v318 = vadd.f32 %v249, %v294
    %v319 = vadd.f32 %v250, %v316
    %s320 = sld [smem:[#allocation2 + $0x24]]
    %v321 = vstv %s320
    %v322 = vmul.f32 %v317, %v321
    %s323 = sld [smem:[#allocation2 + $0x25]]
    %v324 = vstv %s323
    %v325 = vmul.f32 %v318, %v324
    %v326 = vadd.f32 %v322, %v325
    %s327 = sld [smem:[#allocation2 + $0x26]]
    %v328 = vstv %s327
    %v329 = vmul.f32 %v319, %v328
    %v330 = vadd.f32 %v326, %v329
    %s331 = sld [smem:[#allocation4 + $0xc]]
    %v332 = vstv %s331
    %v333 = vadd.f32 %v330, %v332
    %v334 = vmul.f32 %v333, %v333
    %v335 = vmul.f32 %v334, 0.035677407
    %v336 = vadd.f32 %v335, 0.7978846
    %v337 = vmul.f32 %v333, %v336
    %v338 = vmul.f32 %v333, 0.5
    %v339 = vtanh.pop %v337
    %v340 = vadd.f32 %v339, 1.0
    %v341 = vmul.f32 %v338, %v340
    %342 = vst [vmem:[%s3] sm:$0xff] %v341
    // Predicated region
    $region22: #{deep_nn_forward.1} parent=1 // pred_check
      _
    $region23: #{deep_nn_forward.1} parent=1 // pred_check_branch
      %344 = sbr.rel (0) target = $region25
    $region24: #{deep_nn_forward.1} parent=1 // pred_region
      _
    $region25: #{deep_nn_forward.1} parent=1 // pred_fallthru
      _
    // Predicated region
    $region26: #{deep_nn_forward.1} parent=1 // pred_check
      _
    $region27: #{deep_nn_forward.1} parent=1 // pred_check_branch
      %346 = sbr.rel (0) target = $region29
    $region28: #{deep_nn_forward.1} parent=1 // pred_region
      _
    $region29: #{deep_nn_forward.1} parent=1 // pred_fallthru
      _
    %347 = vsyncpa [#allocation3], 1
    %348 = vsyncpa [#allocation5], 1

</llo_original>
